<compile_context>
chip_gen: v5e
topology: v5e:2x2
jax: 0.10.0
libtpu: 0.0.40
codegen_flags: <defaults>
</compile_context>

<pallas_src>
import functools

import jax
import jax.numpy as jnp
from jax.experimental import pallas as pl
from jax.experimental.pallas import tpu as pltpu

EPS = 1e-5  # nn.InstanceNorm2d default eps (affine=False, no running stats)


# ---------------------------------------------------------------------------
# Kernels
# ---------------------------------------------------------------------------

def _adain_fused_kernel(p_ref, x_ref, o_ref, *, inv_hw):
    """One (TC, HW) channel slab: instance-norm stats + folded affine apply.

    p_ref : (TC, 2) f32    lane 0 = 1 + gamma, lane 1 = beta
    x_ref : (TC, HW)       input dtype
    o_ref : (TC, HW)       input dtype
    """
    x = x_ref[...].astype(jnp.float32)

    # Two-pass (centered) statistics over the spatial/lane axis.  The tile is
    # VMEM resident, so the second pass reads VMEM only and hides under DMA.
    mean = jnp.sum(x, axis=-1, keepdims=True) * inv_hw           # (TC, 1)
    xc = x - mean
    var = jnp.sum(xc * xc, axis=-1, keepdims=True) * inv_hw      # (TC, 1)

    g1 = p_ref[:, 0:1]                                           # 1 + gamma
    beta = p_ref[:, 1:2]
    scale = g1 * jax.lax.rsqrt(var + EPS)
    o_ref[...] = (xc * scale + beta).astype(o_ref.dtype)


def _stats_kernel(x_ref, s_ref, ss_ref, *, thw, hw):
    """Large-HW fallback, pass 1: per-channel sum / sum-of-squares.

    x_ref  : (TC, THW) input dtype
    s_ref  : (TC, 1)   f32 accumulator (sum), resident across the HW axis
    ss_ref : (TC, 1)   f32 accumulator (sum of squares)
    """
    h = pl.program_id(2)

    @pl.when(h == 0)
    def _():
        s_ref[...] = jnp.zeros_like(s_ref)
        ss_ref[...] = jnp.zeros_like(ss_ref)

    x = x_ref[...].astype(jnp.float32)
    # Lane mask: out-of-bounds lanes of the (possibly partial) last HW tile
    # hold garbage and must not contribute to the statistics.
    lane = jax.lax.broadcasted_iota(jnp.int32, x.shape, 1)
    x = jnp.where(lane < (hw - h * thw), x, 0.0)

    s_ref[...] += jnp.sum(x, axis=-1, keepdims=True)
    ss_ref[...] += jnp.sum(x * x, axis=-1, keepdims=True)


def _apply_kernel(p_ref, x_ref, o_ref):
    """Large-HW fallback, pass 2: out = x * scale + shift.

    p_ref : (TC, 2) f32   lane 0 = scale, lane 1 = shift
    """
    x = x_ref[...].astype(jnp.float32)
    o_ref[...] = (x * p_ref[:, 0:1] + p_ref[:, 1:2]).astype(o_ref.dtype)


# ---------------------------------------------------------------------------
# Wrapper
# ---------------------------------------------------------------------------

def _sublane_multiple(dtype):
    # (8,128) packed tiling for 4-byte, (16,128) for 2-byte, (32,128) for 1-byte.
    return (4 // jnp.dtype(dtype).itemsize) * 8


def _round_up(a, b):
    return -(-a // b) * b


def _vmem_capacity_bytes():
    try:
        return int(pltpu.get_tpu_info().vmem_capacity_bytes)
    except Exception:
        return 64 << 20  # smallest per-TensorCore VMEM of v5e/v6e/v7x (v7x)


def adain2d(x, style_code, fc_weight, fc_bias, *, io_budget_bytes=None):
    """AdaIN2d forward.

    x: (N, C, H, W); style_code: (N, S); fc_weight: (2C, S); fc_bias: (2C,).
    Returns (N, C, H, W) in x.dtype.
    """
    N, C, H, W = x.shape
    HW = H * W
    itemsize = jnp.dtype(x.dtype).itemsize
    sub = _sublane_multiple(x.dtype)

    # fc hoisted out of the kernel: one tiny XLA matmul, O(N*S*C) FLOPs.
    h = (style_code.astype(jnp.float32) @ fc_weight.T.astype(jnp.float32)
         + fc_bias.astype(jnp.float32))                          # (N, 2C)
    g1 = 1.0 + h[:, :C]                                          # 1 + gamma
    beta = h[:, C:]

    # Generation-aware VMEM budget: ~48 MiB on v7x (64 MiB physical per TC),
    # ~96 MiB on v5e/v6e (128 MiB physical), always set explicitly.
    vmem_cap = _vmem_capacity_bytes()
    vmem_limit = int(min(vmem_cap * 3 // 4, 112 << 20))
    if io_budget_bytes is None:
        io_budget_bytes = vmem_limit - (4 << 20)   # headroom: params bufs, scratch

    # Per-channel-row VMEM cost of the fused kernel: double-buffered in + out
    # (2*2*itemsize) plus ~two live f32 temporaries (x up-cast and x - mean).
    per_row = HW * (4 * itemsize + 8)

    # (N, C, H, W) -> (N, C, HW): free, the array is contiguous.
    x3 = x.reshape(N, C, HW)

    if sub * per_row <= io_budget_bytes:
        # ---------- primary path: full spatial extent in one slab ----------
        tc = (io_budget_bytes // per_row) // sub * sub
        tc = C if C <= tc else tc
        # v7x dual-TensorCore: with a single image make sure the channel axis
        # yields at least two blocks so both cores get work.
        if N == 1 and C >= 2 * sub:
            tc = min(tc, _round_up(-(-C // 2), sub))
        n_cblk = pl.cdiv(C, tc)

        p = jnp.stack([g1, beta], axis=-1)                       # (N, C, 2) f32

        # Put the longer axis first so megacore sharding always sees >= 2.
        if n_cblk >= N:
            grid = (n_cblk, N)
            idx = lambda c, n: (n, c, 0)
        else:
            grid = (N, n_cblk)
            idx = lambda n, c: (n, c, 0)

        kernel = functools.partial(_adain_fused_kernel, inv_hw=1.0 / HW)
        out3 = pl.pallas_call(
            kernel,
            out_shape=jax.ShapeDtypeStruct((N, C, HW), x.dtype),
            grid_spec=pltpu.PrefetchScalarGridSpec(
                num_scalar_prefetch=0,
                grid=grid,
                in_specs=[
                    pl.BlockSpec((pl.Squeezed(), tc, 2), idx),
                    pl.BlockSpec((pl.Squeezed(), tc, HW), idx),
                ],
                out_specs=pl.BlockSpec((pl.Squeezed(), tc, HW), idx),
            ),
            compiler_params=pltpu.CompilerParams(
                dimension_semantics=("parallel", "parallel"),
                vmem_limit_bytes=vmem_limit),
        )(p, x3)
        return out3.reshape(N, C, H, W)

    # ---------- fallback path: H*W too large for a single VMEM slab ----------
    # Two sweeps over x (stats, then apply); the spatial axis is grid-tiled.
    tc = C if C <= sub else sub
    thw = max(128, io_budget_bytes // (tc * (4 * itemsize + 8)) // 128 * 128)
    if thw >= HW:
        thw = HW                       # full spatial extent (always legal)
    n_cblk = pl.cdiv(C, tc)
    n_hwblk = pl.cdiv(HW, thw)

    stats_kernel = functools.partial(_stats_kernel, thw=thw, hw=HW)
    s, ss = pl.pallas_call(
        stats_kernel,
        out_shape=(jax.ShapeDtypeStruct((N, C, 1), jnp.float32),
                   jax.ShapeDtypeStruct((N, C, 1), jnp.float32)),
        grid_spec=pltpu.PrefetchScalarGridSpec(
            num_scalar_prefetch=0,
            grid=(N, n_cblk, n_hwblk),
            in_specs=[pl.BlockSpec((pl.Squeezed(), tc, thw),
                                   lambda n, c, hh: (n, c, hh))],
            out_specs=(pl.BlockSpec((pl.Squeezed(), tc, 1),
                                    lambda n, c, hh: (n, c, 0)),
                       pl.BlockSpec((pl.Squeezed(), tc, 1),
                                    lambda n, c, hh: (n, c, 0))),
        ),
        compiler_params=pltpu.CompilerParams(
            dimension_semantics=("parallel", "parallel", "arbitrary"),
            vmem_limit_bytes=vmem_limit),
    )(x3)

    mean = s[..., 0] / HW                                        # (N, C)
    # TODO(synk): fallback uses E[x^2]-E[x]^2 (saves a third sweep over HBM);
    # the VMEM-resident primary path uses the centered two-pass form.
    var = jnp.maximum(ss[..., 0] / HW - mean * mean, 0.0)
    scale = g1 * jax.lax.rsqrt(var + EPS)
    shift = beta - mean * scale
    p = jnp.stack([scale, shift], axis=-1)                       # (N, C, 2) f32

    out3 = pl.pallas_call(
        _apply_kernel,
        out_shape=jax.ShapeDtypeStruct((N, C, HW), x.dtype),
        grid_spec=pltpu.PrefetchScalarGridSpec(
            num_scalar_prefetch=0,
            grid=(N, n_cblk, n_hwblk),
            in_specs=[
                pl.BlockSpec((pl.Squeezed(), tc, 2),
                             lambda n, c, hh: (n, c, 0)),
                pl.BlockSpec((pl.Squeezed(), tc, thw),
                             lambda n, c, hh: (n, c, hh)),
            ],
            out_specs=pl.BlockSpec((pl.Squeezed(), tc, thw),
                                   lambda n, c, hh: (n, c, hh)),
        ),
        compiler_params=pltpu.CompilerParams(
            dimension_semantics=("parallel", "parallel", "parallel"),
            vmem_limit_bytes=vmem_limit),
    )(p, x3)
    return out3.reshape(N, C, H, W)


# ---------------------------------------------------------------------------
# Reference + self-test
# ---------------------------------------------------------------------------

def _reference(x, style_code, fc_weight, fc_bias):
    # Pure-JAX reference mirroring the PyTorch module.
    N, C, H, W = x.shape
    h = style_code @ fc_weight.T + fc_bias          # (N, 2C)
    gamma = h[:, :C].reshape(N, C, 1, 1)
    beta = h[:, C:].reshape(N, C, 1, 1)
    mean = jnp.mean(x, axis=(2, 3), keepdims=True)
    var = jnp.mean((x - mean) ** 2, axis=(2, 3), keepdims=True)
    xn = (x - mean) / jnp.sqrt(var + EPS)
    return (1.0 + gamma) * xn + beta


if __name__ == "__main__":
    key = jax.random.PRNGKey(0)

    def run_case(n, c, hh, ww, sdim, **kwargs):
        k1, k2, k3, k4 = jax.random.split(jax.random.fold_in(key, n * 1000 + c), 4)
        x = jax.random.normal(k1, (n, c, hh, ww), dtype=jnp.float32)
        style = jax.random.normal(k2, (n, sdim), dtype=jnp.float32)
        fc_w = jax.random.normal(k3, (2 * c, sdim), dtype=jnp.float32) * 0.1
        fc_b = jax.random.normal(k4, (2 * c,), dtype=jnp.float32) * 0.1
        out = jax.block_until_ready(adain2d(x, style, fc_w, fc_b, **kwargs))
        ref = _reference(x, style, fc_w, fc_b)
        assert out.shape == x.shape
        err = float(jnp.max(jnp.abs(out - ref)))
        assert err < 1e-4, err

    # Primary fused path, module-scale shapes (N=2, C=4, 16x16, style_dim=8).
    run_case(2, 4, 16, 16, 8)
    # Primary path: single image (dual-TC split), ragged channel tile,
    # spatial size not a multiple of 128.
    run_case(1, 24, 15, 15, 8)
    # Large-HW fallback path, forced via a tiny synthetic I/O budget.
    run_case(2, 12, 15, 15, 8, io_budget_bytes=40000)

    print("KERNEL_OK")
</pallas_src>

<mosaic_0001>
module attributes {stable_mosaic.version = 11 : i64} {
  func.func @_adain_fused_kernel(%arg0: i32, %arg1: i32, %arg2: memref<1x4x2xf32, #tpu.memory_space<vmem>>, %arg3: memref<1x4x256xf32, #tpu.memory_space<vmem>>, %arg4: memref<1x4x256xf32, #tpu.memory_space<vmem>>) attributes {dimension_semantics = [#tpu.dimension_semantics<parallel>, #tpu.dimension_semantics<parallel>], iteration_bounds = array<i64: 2, 1>, scalar_prefetch = 0 : i64, scratch_operands = 0 : i64, tpu.core_type = #tpu.core_type<tc>, window_params = [{transform_indices = @transform_0, window_bounds = array<i64: 1, 4, 2>}, {transform_indices = @transform_1, window_bounds = array<i64: 1, 4, 256>}, {transform_indices = @transform_2, window_bounds = array<i64: 1, 4, 256>}]} {
    %c0 = arith.constant 0 : index
    %c0_0 = arith.constant 0 : index
    %c0_1 = arith.constant 0 : index
    %0 = vector.load %arg3[%c0, %c0_0, %c0_1] : memref<1x4x256xf32, #tpu.memory_space<vmem>>, vector<1x4x256xf32>
    %1 = vector.shape_cast %0 : vector<1x4x256xf32> to vector<4x256xf32>
    %cst = arith.constant dense<0.000000e+00> : vector<4xf32>
    %2 = vector.multi_reduction <add>, %1, %cst [1] : vector<4x256xf32> to vector<4xf32>
    %3 = vector.shape_cast %2 : vector<4xf32> to vector<4x1xf32>
    %cst_2 = arith.constant 3.906250e-03 : f32
    %4 = vector.broadcast %cst_2 : f32 to vector<4x1xf32>
    %5 = arith.mulf %3, %4 : vector<4x1xf32>
    %6 = vector.broadcast %5 : vector<4x1xf32> to vector<4x256xf32>
    %7 = arith.subf %1, %6 : vector<4x256xf32>
    %8 = arith.mulf %7, %7 : vector<4x256xf32>
    %cst_3 = arith.constant dense<0.000000e+00> : vector<4xf32>
    %9 = vector.multi_reduction <add>, %8, %cst_3 [1] : vector<4x256xf32> to vector<4xf32>
    %10 = vector.shape_cast %9 : vector<4xf32> to vector<4x1xf32>
    %cst_4 = arith.constant 3.906250e-03 : f32
    %11 = vector.broadcast %cst_4 : f32 to vector<4x1xf32>
    %12 = arith.mulf %10, %11 : vector<4x1xf32>
    %c0_5 = arith.constant 0 : index
    %c0_6 = arith.constant 0 : index
    %c0_7 = arith.constant 0 : index
    %13 = vector.load %arg2[%c0_5, %c0_6, %c0_7] : memref<1x4x2xf32, #tpu.memory_space<vmem>>, vector<1x4x1xf32>
    %14 = vector.shape_cast %13 : vector<1x4x1xf32> to vector<4x1xf32>
    %c0_8 = arith.constant 0 : index
    %c0_9 = arith.constant 0 : index
    %c1 = arith.constant 1 : index
    %15 = vector.load %arg2[%c0_8, %c0_9, %c1] : memref<1x4x2xf32, #tpu.memory_space<vmem>>, vector<1x4x1xf32>
    %16 = vector.shape_cast %15 : vector<1x4x1xf32> to vector<4x1xf32>
    %cst_10 = arith.constant 9.99999974E-6 : f32
    %17 = vector.broadcast %cst_10 : f32 to vector<4x1xf32>
    %18 = arith.addf %12, %17 : vector<4x1xf32>
    %19 = math.rsqrt %18 : vector<4x1xf32>
    %20 = arith.mulf %14, %19 : vector<4x1xf32>
    %21 = vector.broadcast %20 : vector<4x1xf32> to vector<4x256xf32>
    %22 = arith.mulf %7, %21 : vector<4x256xf32>
    %23 = vector.broadcast %16 : vector<4x1xf32> to vector<4x256xf32>
    %24 = arith.addf %22, %23 : vector<4x256xf32>
    %c0_11 = arith.constant 0 : index
    %c0_12 = arith.constant 0 : index
    %c0_13 = arith.constant 0 : index
    %25 = vector.load %arg4[%c0_11, %c0_12, %c0_13] : memref<1x4x256xf32, #tpu.memory_space<vmem>>, vector<1x4x256xf32>
    %26 = vector.shape_cast %25 : vector<1x4x256xf32> to vector<4x256xf32>
    %27 = vector.shape_cast %24 : vector<4x256xf32> to vector<1x4x256xf32>
    tpu.vector_store %arg4[%c0_11, %c0_12, %c0_13], %27 {strides = array<i32>} : memref<1x4x256xf32, #tpu.memory_space<vmem>>, vector<1x4x256xf32>,
    return
  }
  func.func @transform_0(%arg0: i32, %arg1: i32) -> (i32, i32, i32) {
    %c0_i32 = arith.constant 0 : i32
    %c0_i32_0 = arith.constant 0 : i32
    return %arg0, %arg1, %c0_i32 : i32, i32, i32
  }
  func.func @transform_1(%arg0: i32, %arg1: i32) -> (i32, i32, i32) {
    %c0_i32 = arith.constant 0 : i32
    %c0_i32_0 = arith.constant 0 : i32
    return %arg0, %arg1, %c0_i32 : i32, i32, i32
  }
  func.func @transform_2(%arg0: i32, %arg1: i32) -> (i32, i32, i32) {
    %c0_i32 = arith.constant 0 : i32
    %c0_i32_0 = arith.constant 0 : i32
    return %arg0, %arg1, %c0_i32 : i32, i32, i32
  }
}

</mosaic_0001>

<llo_original>
// kernel: tpu_custom_call.1
$region0: #{tpu_custom_call.1}
  #allocation0 [shape = 'u32[]', space=smem, size = 0x4, offset = 0x4, fixed_abs, tag = 'smem constant byte address 0x4 - core index']
  #allocation1 [shape = 'u32[72,128]{1,0:T(1,128)}', space=vmem, size = 0x9000, scoped, tag = 'internal scratch']
  %s0 = inlined_call_operand.vmem [shape: f32[2,4,2], index: 0, kind: input, shape index: {}]
  %s1 = inlined_call_operand.hbm [shape: f32[2,4,256], index: 1, kind: input, shape index: {}]
  %s2 = inlined_call_operand.hbm [shape: f32[2,4,256], index: 2, kind: output, shape index: {}]
  %s3 = sld [smem:[#allocation0]]
  $region45: #{tpu_custom_call.1} parent=0
    _
  %s5 = ssub.s32 1, %s3
  %s6 = scalar_select 0, %s5, %s3
  $region1: #{tpu_custom_call.1} parent=0
    #allocation2 [shape = 'u8[8192]{0}', space=vmem, size = 0x2000, scoped, tag = 'input window, operand 1']
    #allocation3 [shape = 's32[2]{0}', space=sflag, size = 0x8, scoped, tag = 'scoped memory for tpu_custom_call.1']
    #allocation4 [shape = 's32[2]{0}', space=sflag, size = 0x8, scoped, tag = 'scoped memory for tpu_custom_call.1']
    #allocation5 [shape = 'u8[8192]{0}', space=vmem, size = 0x2000, scoped, tag = 'output window, operand 0']
    %7 = vsyncpa [#allocation3], 0
    %s8 = scalar_lea.sflag [#allocation3], 1
    %9 = vsyncpa %s8, 0
    %10 = vsyncpa [#allocation4], 0
    %s11 = scalar_lea.sflag [#allocation4], 1
    %12 = vsyncpa %s11, 0
    loop: start=0, step=1, limit=4
    $region2: #{tpu_custom_call.1} parent=1 // loop_pre_header
      _
    $region3: #{tpu_custom_call.1} parent=1 // loop_header
      %s14 = sphi 0, %s18
      %p15 = scmp.ge.s32.totalorder %s14, 4
      %s21 = sphi 0, %s33
      %s22 = sphi 0, %s29
      %s23 = sphi 0, %s21
      %s24 = sphi 0, %s22
      %s25 = sphi 0, %s23
      %s26 = sphi 0, %s24
      %s38 = sphi 0, %s40
      %s41 = sphi 0, %s38
      %s42 = sphi 0, %s41
      %s58 = sphi 0, %s42
      %s66 = sphi 0, %s68
      %s69 = sphi 0, %s66
      %s70 = sphi 0, %s69
      %s86 = sphi 0, %s70
      %s94 = sphi 0, %s96
      %s97 = sphi 0, %s94
      %s98 = sphi 0, %s97
      %s114 = sphi 0, %s98
    $region4: #{tpu_custom_call.1} parent=1 // loop_header_branch
      %17 = sbr.rel (%p15) target = $region8
    $region5: #{tpu_custom_call.1} parent=1 // loop_body
      %s19 = ssub.s32 %s14, 1
      %s20 = ssub.s32 %s14, 2
      %s27 = sadd.s32 1, %s22
      %p28 = scmp.ge.s32.totalorder %s27, 1
      %s29 = scalar_select %p28, 0, %s27
      %s30 = sadd.s32 1, %s21
      %s31 = scalar_select %p28, %s30, %s21
      %p32 = scmp.ge.s32.totalorder %s31, 2
      %s33 = scalar_select %p32, 0, %s31
      %s34 = ssub.s32 %s21, %s33
      %s35 = ssub.s32 %s22, %s29
      %s36 = sor.u32 %s34, %s35
      %p37 = scmp.eq.s32.totalorder %s36, 0
      %s39 = sadd.s32 %s38, 1
      %s40 = scalar_select %p37, %s38, %s39
      %p43 = pneg %p37
      %p44 = scmp.eq.s32.totalorder %s14, 1
      %p45 = por %p43, %p44
      %p46 = scmp.ne.s32.totalorder %s38, %s41
      %p47 = scmp.eq.s32.totalorder %s14, 0
      %p48 = por %p46, %p47
      %p49 = scmp.ne.s32.totalorder %s38, %s41
      %p50 = scmp.eq.s32.totalorder %s19, 1
      %p51 = por %p49, %p50
      %p52 = scmp.ne.s32.totalorder %s41, %s42
      %p53 = scmp.eq.s32.totalorder %s19, 0
      %p54 = por %p52, %p53
      %p55 = scmp.ne.s32.totalorder %s41, %s42
      %p56 = scmp.eq.s32.totalorder %s20, 1
      %p57 = por %p55, %p56
      %p59 = scmp.ne.s32.totalorder %s42, %s58
      %p60 = scmp.eq.s32.totalorder %s20, 0
      %p61 = por %p59, %p60
      %s62 = ssub.s32 %s21, %s33
      %s63 = ssub.s32 %s22, %s29
      %s64 = sor.u32 %s62, %s63
      %p65 = scmp.eq.s32.totalorder %s64, 0
      %s67 = sadd.s32 %s66, 1
      %s68 = scalar_select %p65, %s66, %s67
      %p71 = pneg %p65
      %p72 = scmp.eq.s32.totalorder %s14, 1
      %p73 = por %p71, %p72
      %p74 = scmp.ne.s32.totalorder %s66, %s69
      %p75 = scmp.eq.s32.totalorder %s14, 0
      %p76 = por %p74, %p75
      %p77 = scmp.ne.s32.totalorder %s66, %s69
      %p78 = scmp.eq.s32.totalorder %s19, 1
      %p79 = por %p77, %p78
      %p80 = scmp.ne.s32.totalorder %s69, %s70
      %p81 = scmp.eq.s32.totalorder %s19, 0
      %p82 = por %p80, %p81
      %p83 = scmp.ne.s32.totalorder %s69, %s70
      %p84 = scmp.eq.s32.totalorder %s20, 1
      %p85 = por %p83, %p84
      %p87 = scmp.ne.s32.totalorder %s70, %s86
      %p88 = scmp.eq.s32.totalorder %s20, 0
      %p89 = por %p87, %p88
      %s90 = ssub.s32 %s21, %s33
      %s91 = ssub.s32 %s22, %s29
      %s92 = sor.u32 %s90, %s91
      %p93 = scmp.eq.s32.totalorder %s92, 0
      %s95 = sadd.s32 %s94, 1
      %s96 = scalar_select %p93, %s94, %s95
      %p99 = pneg %p93
      %p100 = scmp.eq.s32.totalorder %s14, 1
      %p101 = por %p99, %p100
      %p102 = scmp.ne.s32.totalorder %s94, %s97
      %p103 = scmp.eq.s32.totalorder %s14, 0
      %p104 = por %p102, %p103
      %p105 = scmp.ne.s32.totalorder %s94, %s97
      %p106 = scmp.eq.s32.totalorder %s19, 1
      %p107 = por %p105, %p106
      %p108 = scmp.ne.s32.totalorder %s97, %s98
      %p109 = scmp.eq.s32.totalorder %s19, 0
      %p110 = por %p108, %p109
      %p111 = scmp.ne.s32.totalorder %s97, %s98
      %p112 = scmp.eq.s32.totalorder %s20, 1
      %p113 = por %p111, %p112
      %p115 = scmp.ne.s32.totalorder %s98, %s114
      %p116 = scmp.eq.s32.totalorder %s20, 0
      %p117 = por %p115, %p116
      %p118 = scmp.le.s32.totalorder 1, %s14
      %p119 = scmp.lt.s32.totalorder %s14, 3
      %p120 = pnand %p118, %p119
      %p121 = pneg %p120
      // Predicated region
      $region9: #{tpu_custom_call.1} parent=5 // pred_check
        _
      $region10: #{tpu_custom_call.1} parent=5 // pred_check_branch
        %123 = sbr.rel (%p120) target = $region12
      $region11: #{tpu_custom_call.1} parent=5 // pred_region
        %s124 = ssub.s32 %s14, 1
      $region12: #{tpu_custom_call.1} parent=5 // pred_fallthru
        _
      %p125 = scmp.lt.s32.totalorder %s14, 2
      // Predicated region
      $region13: #{tpu_custom_call.1} parent=5 // pred_check
        %p126 = pneg %p125
      $region14: #{tpu_custom_call.1} parent=5 // pred_check_branch
        %128 = sbr.rel (%p126) target = $region16
      $region15: #{tpu_custom_call.1} parent=5 // pred_region
        // Predicated region
        $region17: #{tpu_custom_call.1} parent=15 // pred_check
          %p129 = pneg %p48
        $region18: #{tpu_custom_call.1} parent=15 // pred_check_branch
          %131 = sbr.rel (%p129) target = $region20
        $region19: #{tpu_custom_call.1} parent=15 // pred_region
          %p132 = scmp.lt.s32.totalorder %s21, 1
          %s133 = scalar_select %p132, %s21, 1
          %p134 = scmp.lt.s32.totalorder %s22, 0
          %s135 = scalar_select %p134, %s22, 0
          %s136 = sadd.s32 %s135, %s133
          %s137 = smul.addr %s136, 4
          %s138 = scalar_lea.vmem %s0, %s137
        $region20: #{tpu_custom_call.1} parent=15 // pred_fallthru
          _
        // Predicated region
        $region21: #{tpu_custom_call.1} parent=15 // pred_check
          %p139 = pneg %p76
        $region22: #{tpu_custom_call.1} parent=15 // pred_check_branch
          %141 = sbr.rel (%p139) target = $region24
        $region23: #{tpu_custom_call.1} parent=15 // pred_region
          %s142 = sand.u32 %s66, 1
          %s143 = scalar_lea.sflag [#allocation3], %s142
          %s144 = sand.u32 %s66, 1
          %s145 = smul.addr %s144, 8
          %s146 = scalar_lea.vmem [#allocation2], %s145
          %148 = vsyncadd %s143, 0
          %s149 = smul.addr %s22, 2
          %s150 = smul.addr %s21, 2
          %s151 = sadd.s32 %s149, %s150
          %s152 = smul.addr %s151, 4
          %s153 = scalar_lea.hbm %s1, %s152
          %s155 = sshll.u32 %s153, 4
          %s156 = int_to_ptr.hbm [resolvable:$true] %s155
          %s157 = sshll.u32 %s146, 4
          %s158 = int_to_ptr.vmem [resolvable:$true] %s157
          %160 = dma.hbm_to_vmem [thread:$0]  %s156, 128, %s158, %s143
        $region24: #{tpu_custom_call.1} parent=15 // pred_fallthru
          _
      $region16: #{tpu_custom_call.1} parent=5 // pred_fallthru
        _
      %p161 = scmp.le.s32.totalorder 1, %s14
      %p162 = scmp.lt.s32.totalorder %s14, 3
      %p163 = pnand %p161, %p162
      %p164 = pneg %p163
      // Predicated region
      $region25: #{tpu_custom_call.1} parent=5 // pred_check
        _
      $region26: #{tpu_custom_call.1} parent=5 // pred_check_branch
        %166 = sbr.rel (%p163) target = $region28
      $region27: #{tpu_custom_call.1} parent=5 // pred_region
        %s167 = ssub.s32 %s14, 1
        %s168 = sand.u32 %s69, 1
        %s169 = scalar_lea.sflag [#allocation3], %s168
        %s170 = sand.u32 %s69, 1
        %s171 = smul.addr %s170, 8
        %s172 = scalar_lea.vmem [#allocation2], %s171
        // Predicated region
        $region29: #{tpu_custom_call.1} parent=27 // pred_check
          %p173 = pneg %p82
        $region30: #{tpu_custom_call.1} parent=27 // pred_check_branch
          %175 = sbr.rel (%p173) target = $region32
        $region31: #{tpu_custom_call.1} parent=27 // pred_region
          %177 = dma.done %s169, 128
        $region32: #{tpu_custom_call.1} parent=27 // pred_fallthru
          _
        %p178 = scmp.lt.s32.totalorder %s23, 1
        %s179 = scalar_select %p178, %s23, 1
        %p180 = scmp.lt.s32.totalorder %s24, 0
        %s181 = scalar_select %p180, %s24, 0
        %s182 = sadd.s32 %s181, %s179
        %s183 = smul.addr %s182, 4
        %s184 = scalar_lea.vmem %s0, %s183
        %p185 = pneg %p54
        %p186 = pneg %p51
        %s187 = sand.u32 %s69, 1
        %s188 = scalar_lea.sflag [#allocation3], %s187
        %s189 = sand.u32 %s69, 1
        %s190 = smul.addr %s189, 8
        %s191 = scalar_lea.vmem [#allocation2], %s190
        %p192 = pneg %p82
        %p193 = pneg %p79
        %p194 = pneg %p110
        %p195 = pneg %p107
        %s196 = sand.u32 %s97, 1
        %s197 = scalar_lea.sflag [#allocation4], %s196
        %s198 = sand.u32 %s97, 1
        %s199 = smul.addr %s198, 8
        %s200 = scalar_lea.vmem [#allocation5], %s199
        %p201 = scmp.lt.s32.totalorder %s23, 1
        %s202 = scalar_select %p201, %s23, 1
        %p203 = scmp.lt.s32.totalorder %s24, 0
        %s204 = scalar_select %p203, %s24, 0
        %s205 = sadd.s32 %s204, %s202
        %s206 = smul.addr %s205, 4
        %s207 = scalar_lea.vmem %s0, %s206
        %v208 = vld [vmem:[%s172] sm:$0xff]
        %210 = vst [vmem:[#allocation1] ss:$2 sm:$0xff] %v208
        %v211 = vld.sshfl [vmem:[#allocation1] sm:$0xff pattern:$0x75316420]
        %v212 = vld.sshfl [vmem:[#allocation1 + $0x8] sm:$0xff pattern:$0x75316420]
        %vm215 = vcmask 1043456
        %v216 = vsel %vm215, %v211, 0.0
        %v217 = vsel %vm215, %v212, 0.0
        %v218 = vadd.f32 %v216, %v217
        %219 = vadd.xlane.f32.xlu0 %v218
        %v220 = vpop.xlane.xlu0 %219
        %v221 = vmul.f32 %v220, 0.00390625
        %v224 = vunpack.c.l.s4 839922192
        %v225 = vunpack.c.0.s8 %v224
        %v226 = vperm.slane %v221, %v225
        %v228 = vsub.f32 %v208, %v226
        %v229 = vmul.f32 %v228, %v228
        %231 = vst [vmem:[#allocation1] ss:$2 sm:$0xff] %v229
        %v232 = vld.sshfl [vmem:[#allocation1] sm:$0xff pattern:$0x75316420]
        %v233 = vld.sshfl [vmem:[#allocation1 + $0x8] sm:$0xff pattern:$0x75316420]
        %v236 = vsel %vm215, %v232, 0.0
        %v237 = vsel %vm215, %v233, 0.0
        %v238 = vadd.f32 %v236, %v237
        %239 = vadd.xlane.f32.xlu0 %v238
        %v240 = vpop.xlane.xlu0 %239
        %v241 = vmul.f32 %v240, 0.00390625
        %v242 = vld [vmem:[%s207] sm:$0xf]
        %v243 = vadd.f32 %v241, 1e-05
        %v244 = vrsqrt.pop %v243
        %v245 = vmul.f32 %v244, %v243
        %v246 = vmul.f32 %v245, %v244
        %v247 = vmul.f32 0.5, %v246
        %v248 = vsub.f32 1.5, %v247
        %v249 = vmul.f32 %v244, %v248
        %vm250 = vweird.f32 %v243
        %vm251 = vweird.f32 %v244
        %vm252 = vmor %vm250, %vm251
        %v253 = vsel %vm252, %v244, %v249
        %v254 = vmul.f32 %v242, %v253
        %256 = vset.pattern.permute.xlu0 0
        %257 = vperm.xlu0 %256, %v254
        %v258 = vpop.permute.xlu0 %257
        %v260 = vunpack.c.l.s4 839922192
        %v261 = vunpack.c.0.s8 %v260
        %v262 = vperm.slane %v258, %v261
        %v264 = vmul.f32 %v228, %v262
        %266 = vset.pattern.permute.xlu0 1
        %267 = vperm.xlu0 %266, %v242
        %v268 = vpop.permute.xlu0 %267
        %v270 = vunpack.c.l.s4 839922192
        %v271 = vunpack.c.0.s8 %v270
        %v272 = vperm.slane %v268, %v271
        %v274 = vadd.f32 %v264, %v272
        %275 = vst [vmem:[%s200] sm:$0xff] %v274
        %s276 = sand.u32 %s97, 1
        %s277 = scalar_lea.sflag [#allocation4], %s276
        %s278 = sand.u32 %s97, 1
        %s279 = smul.addr %s278, 8
        %s280 = scalar_lea.vmem [#allocation5], %s279
        // Predicated region
        $region33: #{tpu_custom_call.1} parent=27 // pred_check
          %p281 = pneg %p107
        $region34: #{tpu_custom_call.1} parent=27 // pred_check_branch
          %283 = sbr.rel (%p281) target = $region36
        $region35: #{tpu_custom_call.1} parent=27 // pred_region
          %285 = vsyncadd %s277, 0
          %s286 = smul.addr %s24, 2
          %s287 = smul.addr %s23, 2
          %s288 = sadd.s32 %s286, %s287
          %s289 = smul.addr %s288, 4
          %s290 = scalar_lea.hbm %s2, %s289
          %s292 = sshll.u32 %s280, 4
          %s293 = int_to_ptr.vmem [resolvable:$true] %s292
          %s294 = sshll.u32 %s290, 4
          %s295 = int_to_ptr.hbm [resolvable:$true] %s294
          %297 = dma.vmem_to_hbm [thread:$0]  %s293, 128, %s295, %s277
        $region36: #{tpu_custom_call.1} parent=27 // pred_fallthru
          _
      $region28: #{tpu_custom_call.1} parent=5 // pred_fallthru
        _
      %p298 = scmp.le.s32.totalorder 2, %s14
      // Predicated region
      $region37: #{tpu_custom_call.1} parent=5 // pred_check
        %p299 = pneg %p298
      $region38: #{tpu_custom_call.1} parent=5 // pred_check_branch
        %301 = sbr.rel (%p299) target = $region40
      $region39: #{tpu_custom_call.1} parent=5 // pred_region
        %s302 = ssub.s32 %s14, 2
        // Predicated region
        $region41: #{tpu_custom_call.1} parent=39 // pred_check
          %p303 = pneg %p113
        $region42: #{tpu_custom_call.1} parent=39 // pred_check_branch
          %305 = sbr.rel (%p303) target = $region44
        $region43: #{tpu_custom_call.1} parent=39 // pred_region
          %s306 = sand.u32 %s98, 1
          %s307 = scalar_lea.sflag [#allocation4], %s306
          %s308 = sand.u32 %s98, 1
          %s309 = smul.addr %s308, 8
          %s310 = scalar_lea.vmem [#allocation5], %s309
          %312 = dma.done %s307, 128
        $region44: #{tpu_custom_call.1} parent=39 // pred_fallthru
          _
      $region40: #{tpu_custom_call.1} parent=5 // pred_fallthru
        _
    $region6: #{tpu_custom_call.1} parent=1 // loop_footer
      %s18 = sadd.s32 1, %s14
    $region7: #{tpu_custom_call.1} parent=1 // loop_footer_branch
      %13 = sbr.rel target = $region3
    $region8: #{tpu_custom_call.1} parent=1 // loop_exit
      _
    %313 = vsyncpa [#allocation3], 1
    %s314 = scalar_lea.sflag [#allocation3], 1
    %315 = vsyncpa %s314, 1
    %316 = vsyncpa [#allocation4], 1
    %s317 = scalar_lea.sflag [#allocation4], 1
    %318 = vsyncpa %s317, 1

</llo_original>
